<compile_context>
chip_gen: v7x
topology: tpu7x:2x2x1
jax: 0.10.0
libtpu: 0.0.40
codegen_flags: <defaults>
</compile_context>

<pallas_src>
import functools

import jax
import jax.numpy as jnp
from jax.experimental import pallas as pl
from jax.experimental.pallas import tpu as pltpu


def _addnorm_kernel(x_ref, y_ref, gamma_ref, beta_ref, o_ref, *, eps, inv_d):
    # x_ref/y_ref/o_ref: (rows_tile, d); gamma/beta: (1, d) f32 (resident across grid).
    s = x_ref[...].astype(jnp.float32) + y_ref[...].astype(jnp.float32)

    # Single-pass statistics: mean and E[s^2] from one live full-tile temporary.
    mean = jnp.sum(s, axis=-1, keepdims=True) * inv_d
    mean_sq = jnp.sum(s * s, axis=-1, keepdims=True) * inv_d
    var = jnp.maximum(mean_sq - mean * mean, 0.0)  # unbiased=False; clamp cancellation

    normed = (s - mean) * jax.lax.rsqrt(var + eps)
    o_ref[...] = (gamma_ref[...] * normed + beta_ref[...]).astype(o_ref.dtype)


def _tile_policy():
    """Generation-aware (rows_cap, tile-size budget, vmem_limit ceiling) in bytes."""
    mib = 1024 * 1024
    kind = ""
    try:
        kind = jax.devices()[0].device_kind.lower()
    except Exception:
        pass
    vmem_phys = None
    try:
        info = pltpu.get_tpu_info()
        vmem_phys = getattr(info, "vmem_capacity_bytes", None)
        if vmem_phys is not None:
            vmem_phys = int(vmem_phys)
    except Exception:
        vmem_phys = None

    if "v7" in kind or (vmem_phys is not None and vmem_phys <= 64 * mib):
        # v7x: 64 MiB VMEM, ~3.2 TB/s HBM. Keep the large 1024-row tile so the
        # ~0.35 us/step overhead stays amortized; allow up to ~48 MiB scoped VMEM.
        return 1024, 28 * mib, 48 * mib
    if "v5" in kind:
        # v5e: ~0.8 TB/s HBM; 512 rows is already >90% of roofline and keeps the
        # footprint well under the default scoped limit.
        return 512, 16 * mib, 32 * mib
    # v6e (and unknown): curve flattens at 512-1024 rows; 32 MiB scoped limit.
    return 1024, 24 * mib, 32 * mib


def add_norm(x, sublayer_output, gamma, beta, *, eps=1e-6, rows_tile=None):
    """AddNorm forward: LayerNorm(x + sublayer_output) with per-feature affine."""
    assert x.shape == sublayer_output.shape
    b, s_len, d = x.shape
    rows = b * s_len
    itemsize = jnp.dtype(x.dtype).itemsize

    # No feature-dim padding: BlockSpec last dim is the full extent `d`, so a non-128
    # multiple only costs masked vst in the kernel (far cheaper than pad/slice copies).
    x2 = x.reshape(rows, d)
    y2 = sublayer_output.reshape(rows, d)
    g2 = gamma.astype(jnp.float32).reshape(1, d)
    b2 = beta.astype(jnp.float32).reshape(1, d)

    rows_cap, budget, vmem_ceiling = _tile_policy()

    # Sublane packing minimum: 8 rows for f32, 16 for bf16, 32 for 8-bit dtypes.
    row_align = max(8, 32 // max(itemsize, 1))

    # Per-row VMEM footprint: 3 I/O buffers x 2 (double-buffered) x itemsize, plus
    # ~3 full-tile f32 intermediates (~12 B/elem) inside the kernel body.
    per_row = (6 * itemsize + 12) * d

    if rows_tile is None:
        rows_tile = min(rows_cap, max(row_align, budget // max(per_row, 1)))
    rows_tile = max(row_align, (int(rows_tile) // row_align) * row_align)
    rows_rounded = ((rows + row_align - 1) // row_align) * row_align
    rows_tile = min(rows_tile, rows_rounded)

    grid = (pl.cdiv(rows, rows_tile),)

    # vmem_limit from the actual footprint (+25% headroom), clamped to the per-gen cap.
    footprint = rows_tile * per_row + 2 * 2 * d * 4  # + gamma/beta (double-buffered)
    vmem_limit = int(min(max(int(footprint * 1.25), 8 * 1024 * 1024), vmem_ceiling))

    kernel = functools.partial(_addnorm_kernel, eps=float(eps), inv_d=1.0 / float(d))

    out2 = pl.pallas_call(
        kernel,
        out_shape=jax.ShapeDtypeStruct((rows, d), x.dtype),
        grid_spec=pltpu.PrefetchScalarGridSpec(
            num_scalar_prefetch=0,
            grid=grid,
            in_specs=[
                pl.BlockSpec((rows_tile, d), lambda i: (i, 0)),
                pl.BlockSpec((rows_tile, d), lambda i: (i, 0)),
                pl.BlockSpec((1, d), lambda i: (0, 0)),
                pl.BlockSpec((1, d), lambda i: (0, 0)),
            ],
            out_specs=pl.BlockSpec((rows_tile, d), lambda i: (i, 0)),
        ),
        compiler_params=pltpu.CompilerParams(
            # TODO(synk): on v7x, verify both TensorCores stream (switch this axis to
            # pltpu.CORE_PARALLEL if a profile shows one idle TC).
            dimension_semantics=("parallel",),
            vmem_limit_bytes=vmem_limit,
        ),
        cost_estimate=pl.CostEstimate(
            flops=8 * rows * d,
            transcendentals=rows,  # one rsqrt per row
            bytes_accessed=3 * rows * d * itemsize + 2 * d * 4,  # 2 reads + 1 write + gamma/beta
        ),
    )(x2, y2, g2, b2)

    return out2.reshape(b, s_len, d)


def _reference_add_norm(x, y, gamma, beta, eps=1e-6):
    s = x + y
    mean = jnp.mean(s, axis=-1, keepdims=True)
    var = jnp.mean((s - mean) ** 2, axis=-1, keepdims=True)
    normed = (s - mean) / jnp.sqrt(var + eps)
    return gamma * normed + beta


if __name__ == "__main__":
    key = jax.random.PRNGKey(0)

    # --- small demo shape (module spec): [batch=2, seq=8, d_model=32] ---
    batch, seq, d_model = 2, 8, 32
    k1, k2 = jax.random.split(key)
    x = jax.random.normal(k1, (batch, seq, d_model), dtype=jnp.float32)
    sub = jax.random.normal(k2, (batch, seq, d_model), dtype=jnp.float32)

    # deterministic parameter init (matches LayerNorm.__init__: ones / zeros)
    gamma = jnp.ones((d_model,), dtype=jnp.float32)
    beta = jnp.zeros((d_model,), dtype=jnp.float32)

    # TODO(synk): dropout is identity in eval mode; training-mode dropout masking not implemented.
    out = add_norm(x, sub, gamma, beta, eps=1e-6)
    out = jax.block_until_ready(out)
    ref = _reference_add_norm(x, sub, gamma, beta, eps=1e-6)
    assert out.shape == (batch, seq, d_model)
    assert jnp.allclose(out, ref, atol=1e-5, rtol=1e-5), "mismatch vs reference (d%128!=0 path)"

    # --- second check: lane-dense (d % 128 == 0) path ---
    b2s, s2s, d2s = 2, 64, 256
    k3, k4 = jax.random.split(k2)
    x2 = jax.random.normal(k3, (b2s, s2s, d2s), dtype=jnp.float32)
    sub2 = jax.random.normal(k4, (b2s, s2s, d2s), dtype=jnp.float32)
    g2 = jnp.ones((d2s,), dtype=jnp.float32)
    be2 = jnp.zeros((d2s,), dtype=jnp.float32)
    out2 = jax.block_until_ready(add_norm(x2, sub2, g2, be2, eps=1e-6))
    ref2 = _reference_add_norm(x2, sub2, g2, be2, eps=1e-6)
    assert jnp.allclose(out2, ref2, atol=1e-5, rtol=1e-5), "mismatch vs reference (lane-dense path)"

    print("KERNEL_OK")
</pallas_src>

<mosaic_0001>
module attributes {stable_mosaic.version = 11 : i64} {
  func.func @_addnorm_kernel(%arg0: i32, %arg1: memref<16x32xf32, #tpu.memory_space<vmem>>, %arg2: memref<16x32xf32, #tpu.memory_space<vmem>>, %arg3: memref<1x32xf32, #tpu.memory_space<vmem>>, %arg4: memref<1x32xf32, #tpu.memory_space<vmem>>, %arg5: memref<16x32xf32, #tpu.memory_space<vmem>>) attributes {dimension_semantics = [#tpu.dimension_semantics<parallel>], iteration_bounds = array<i64: 1>, scalar_prefetch = 0 : i64, scratch_operands = 0 : i64, tpu.core_type = #tpu.core_type<tc>, window_params = [{transform_indices = @transform_0, window_bounds = array<i64: 16, 32>}, {transform_indices = @transform_1, window_bounds = array<i64: 16, 32>}, {pipeline_mode = #tpu.pipeline_mode<synchronous>, transform_indices = @transform_2, window_bounds = array<i64: 1, 32>}, {pipeline_mode = #tpu.pipeline_mode<synchronous>, transform_indices = @transform_3, window_bounds = array<i64: 1, 32>}, {transform_indices = @transform_4, window_bounds = array<i64: 16, 32>}]} {
    %c0 = arith.constant 0 : index
    %c0_0 = arith.constant 0 : index
    %0 = vector.load %arg1[%c0, %c0_0] : memref<16x32xf32, #tpu.memory_space<vmem>>, vector<16x32xf32>
    %c0_1 = arith.constant 0 : index
    %c0_2 = arith.constant 0 : index
    %1 = vector.load %arg2[%c0_1, %c0_2] : memref<16x32xf32, #tpu.memory_space<vmem>>, vector<16x32xf32>
    %2 = arith.addf %0, %1 : vector<16x32xf32>
    %cst = arith.constant dense<0.000000e+00> : vector<16xf32>
    %3 = vector.multi_reduction <add>, %2, %cst [1] : vector<16x32xf32> to vector<16xf32>
    %4 = vector.shape_cast %3 : vector<16xf32> to vector<16x1xf32>
    %cst_3 = arith.constant 3.125000e-02 : f32
    %5 = vector.broadcast %cst_3 : f32 to vector<16x1xf32>
    %6 = arith.mulf %4, %5 : vector<16x1xf32>
    %7 = arith.mulf %2, %2 : vector<16x32xf32>
    %cst_4 = arith.constant dense<0.000000e+00> : vector<16xf32>
    %8 = vector.multi_reduction <add>, %7, %cst_4 [1] : vector<16x32xf32> to vector<16xf32>
    %9 = vector.shape_cast %8 : vector<16xf32> to vector<16x1xf32>
    %cst_5 = arith.constant 3.125000e-02 : f32
    %10 = vector.broadcast %cst_5 : f32 to vector<16x1xf32>
    %11 = arith.mulf %9, %10 : vector<16x1xf32>
    %12 = arith.mulf %6, %6 : vector<16x1xf32>
    %13 = arith.subf %11, %12 : vector<16x1xf32>
    %cst_6 = arith.constant 0.000000e+00 : f32
    %14 = vector.broadcast %cst_6 : f32 to vector<16x1xf32>
    %15 = arith.maximumf %13, %14 : vector<16x1xf32>
    %16 = vector.broadcast %6 : vector<16x1xf32> to vector<16x32xf32>
    %17 = arith.subf %2, %16 : vector<16x32xf32>
    %cst_7 = arith.constant 9.99999997E-7 : f32
    %18 = vector.broadcast %cst_7 : f32 to vector<16x1xf32>
    %19 = arith.addf %15, %18 : vector<16x1xf32>
    %20 = math.rsqrt %19 : vector<16x1xf32>
    %21 = vector.broadcast %20 : vector<16x1xf32> to vector<16x32xf32>
    %22 = arith.mulf %17, %21 : vector<16x32xf32>
    %c0_8 = arith.constant 0 : index
    %c0_9 = arith.constant 0 : index
    %23 = vector.load %arg3[%c0_8, %c0_9] : memref<1x32xf32, #tpu.memory_space<vmem>>, vector<1x32xf32>
    %24 = vector.broadcast %23 : vector<1x32xf32> to vector<16x32xf32>
    %25 = arith.mulf %24, %22 : vector<16x32xf32>
    %c0_10 = arith.constant 0 : index
    %c0_11 = arith.constant 0 : index
    %26 = vector.load %arg4[%c0_10, %c0_11] : memref<1x32xf32, #tpu.memory_space<vmem>>, vector<1x32xf32>
    %27 = vector.broadcast %26 : vector<1x32xf32> to vector<16x32xf32>
    %28 = arith.addf %25, %27 : vector<16x32xf32>
    %c0_12 = arith.constant 0 : index
    %c0_13 = arith.constant 0 : index
    %29 = vector.load %arg5[%c0_12, %c0_13] : memref<16x32xf32, #tpu.memory_space<vmem>>, vector<16x32xf32>
    tpu.vector_store %arg5[%c0_12, %c0_13], %28 {strides = array<i32>} : memref<16x32xf32, #tpu.memory_space<vmem>>, vector<16x32xf32>,
    return
  }
  func.func @transform_0(%arg0: i32) -> (i32, i32) {
    %c0_i32 = arith.constant 0 : i32
    %c0_i32_0 = arith.constant 0 : i32
    return %arg0, %c0_i32 : i32, i32
  }
  func.func @transform_1(%arg0: i32) -> (i32, i32) {
    %c0_i32 = arith.constant 0 : i32
    %c0_i32_0 = arith.constant 0 : i32
    return %arg0, %c0_i32 : i32, i32
  }
  func.func @transform_2(%arg0: i32) -> (i32, i32) {
    %c0_i32 = arith.constant 0 : i32
    %c0_i32_0 = arith.constant 0 : i32
    %c0_i32_1 = arith.constant 0 : i32
    return %c0_i32, %c0_i32_0 : i32, i32
  }
  func.func @transform_3(%arg0: i32) -> (i32, i32) {
    %c0_i32 = arith.constant 0 : i32
    %c0_i32_0 = arith.constant 0 : i32
    %c0_i32_1 = arith.constant 0 : i32
    return %c0_i32, %c0_i32_0 : i32, i32
  }
  func.func @transform_4(%arg0: i32) -> (i32, i32) {
    %c0_i32 = arith.constant 0 : i32
    %c0_i32_0 = arith.constant 0 : i32
    return %arg0, %c0_i32 : i32, i32
  }
}

</mosaic_0001>

<llo_original>
// kernel: tpu_custom_call.1
$region0: #{tpu_custom_call.1}
  #allocation0 [shape = 'u32[]', space=smem, size = 0x4, offset = 0x4, fixed_abs, tag = 'smem constant byte address 0x4 - core index']
  #allocation1 [shape = 'u32[144,128]{1,0:T(1,128)}', space=vmem, size = 0x12000, scoped, tag = 'internal scratch']
  %s0 = inlined_call_operand.hbm [shape: f32[16,32], index: 0, kind: input, shape index: {}]
  %s1 = inlined_call_operand.hbm [shape: f32[16,32], index: 1, kind: input, shape index: {}]
  %s2 = inlined_call_operand.vmem [shape: f32[1,32], index: 2, kind: input, shape index: {}]
  %s3 = inlined_call_operand.vmem [shape: f32[1,32], index: 3, kind: input, shape index: {}]
  %s4 = inlined_call_operand.hbm [shape: f32[16,32], index: 4, kind: output, shape index: {}]
  %s5 = sld [smem:[#allocation0]]
  $region34: #{tpu_custom_call.1} parent=0
    _
  %s7 = ssub.s32 1, %s5
  %s8 = scalar_select 0, %s7, %s5
  $region1: #{tpu_custom_call.1} parent=0
    #allocation2 [shape = 'u8[8192]{0}', space=vmem, size = 0x2000, scoped, tag = 'input window, operand 0, single buffered']
    #allocation3 [shape = 's32[1]{0}', space=sflag, size = 0x4, scoped, tag = 'scoped memory for tpu_custom_call.1']
    #allocation4 [shape = 's32[1]{0}', space=sflag, size = 0x4, scoped, tag = 'scoped memory for tpu_custom_call.1']
    #allocation5 [shape = 'u8[8192]{0}', space=vmem, size = 0x2000, scoped, tag = 'input window, operand 1, single buffered']
    #allocation6 [shape = 's32[1]{0}', space=sflag, size = 0x4, scoped, tag = 'scoped memory for tpu_custom_call.1']
    #allocation7 [shape = 'u8[8192]{0}', space=vmem, size = 0x2000, scoped, tag = 'output window, operand 0, single buffered']
    %9 = vsyncpa [#allocation3], 0
    %10 = vsyncpa [#allocation6], 0
    %11 = vsyncpa [#allocation4], 0
    // Predicated region
    $region2: #{tpu_custom_call.1} parent=1 // pred_check
      _
    $region3: #{tpu_custom_call.1} parent=1 // pred_check_branch
      %13 = sbr.rel (0) target = $region5
    $region4: #{tpu_custom_call.1} parent=1 // pred_region
      %s15 = ssub.s32 256, 256
      %16 = vsyncadd [#allocation3], %s15
      %s17 = sshll.u32 [#allocation2], 4
      %s18 = int_to_ptr.vmem [resolvable:$true] %s17
      %23 = dma.hbm_to_vmem [thread:$0]  %s0, 256, %s18, [#allocation3], 128, 128, 8
    $region5: #{tpu_custom_call.1} parent=1 // pred_fallthru
      _
    // Predicated region
    $region6: #{tpu_custom_call.1} parent=1 // pred_check
      _
    $region7: #{tpu_custom_call.1} parent=1 // pred_check_branch
      %25 = sbr.rel (0) target = $region9
    $region8: #{tpu_custom_call.1} parent=1 // pred_region
      %s27 = ssub.s32 256, 256
      %28 = vsyncadd [#allocation6], %s27
      %s29 = sshll.u32 [#allocation5], 4
      %s30 = int_to_ptr.vmem [resolvable:$true] %s29
      %35 = dma.hbm_to_vmem [thread:$0]  %s1, 256, %s30, [#allocation6], 128, 128, 8
    $region9: #{tpu_custom_call.1} parent=1 // pred_fallthru
      _
    // Predicated region
    $region10: #{tpu_custom_call.1} parent=1 // pred_check
      _
    $region11: #{tpu_custom_call.1} parent=1 // pred_check_branch
      %37 = sbr.rel (0) target = $region13
    $region12: #{tpu_custom_call.1} parent=1 // pred_region
      _
    $region13: #{tpu_custom_call.1} parent=1 // pred_fallthru
      _
    // Predicated region
    $region14: #{tpu_custom_call.1} parent=1 // pred_check
      _
    $region15: #{tpu_custom_call.1} parent=1 // pred_check_branch
      %39 = sbr.rel (0) target = $region17
    $region16: #{tpu_custom_call.1} parent=1 // pred_region
      _
    $region17: #{tpu_custom_call.1} parent=1 // pred_fallthru
      _
    // Predicated region
    $region18: #{tpu_custom_call.1} parent=1 // pred_check
      _
    $region19: #{tpu_custom_call.1} parent=1 // pred_check_branch
      %41 = sbr.rel (0) target = $region21
    $region20: #{tpu_custom_call.1} parent=1 // pred_region
      %42 = dma.done [#allocation3], 256
    $region21: #{tpu_custom_call.1} parent=1 // pred_fallthru
      _
    // Predicated region
    $region22: #{tpu_custom_call.1} parent=1 // pred_check
      _
    $region23: #{tpu_custom_call.1} parent=1 // pred_check_branch
      %44 = sbr.rel (0) target = $region25
    $region24: #{tpu_custom_call.1} parent=1 // pred_region
      %45 = dma.done [#allocation6], 256
    $region25: #{tpu_custom_call.1} parent=1 // pred_fallthru
      _
    %v46 = vld [vmem:[#allocation2] sm:$0xff]
    %v47 = vld [vmem:[#allocation2 + $0x8] sm:$0xff]
    %v48 = vld [vmem:[#allocation5] sm:$0xff]
    %v49 = vld [vmem:[#allocation5 + $0x8] sm:$0xff]
    %v50 = vadd.f32 %v46, %v48
    %v51 = vadd.f32 %v47, %v49
    %vm52 = vcmask 261120
    %v53 = vsel %vm52, %v50, 0.0
    %54 = vadd.xlane.f32.xlu0 %v53
    %v55 = vpop.xlane.xlu0 %54
    %v56 = vsel %vm52, %v51, 0.0
    %57 = vadd.xlane.f32.xlu0 %v56
    %v58 = vpop.xlane.xlu0 %57
    %v59 = vmul.f32 %v55, 0.03125
    %v60 = vmul.f32 %v58, 0.03125
    %v61 = vmul.f32 %v50, %v50
    %v62 = vmul.f32 %v51, %v51
    %v63 = vsel %vm52, %v61, 0.0
    %64 = vadd.xlane.f32.xlu0 %v63
    %v65 = vpop.xlane.xlu0 %64
    %v66 = vsel %vm52, %v62, 0.0
    %67 = vadd.xlane.f32.xlu0 %v66
    %v68 = vpop.xlane.xlu0 %67
    %v69 = vmul.f32 %v65, 0.03125
    %v70 = vmul.f32 %v68, 0.03125
    %v71 = vmul.f32 %v59, %v59
    %v72 = vmul.f32 %v60, %v60
    %v73 = vsub.f32 %v69, %v71
    %v74 = vsub.f32 %v70, %v72
    %v75 = vmax.f32 %v73, 0.0
    %v76 = vmax.f32 %v74, 0.0
    %v77 = vsub.f32 %v50, %v59
    %v78 = vsub.f32 %v51, %v60
    %v79 = vadd.f32 %v75, 1e-06
    %v80 = vadd.f32 %v76, 1e-06
    %v81 = vrsqrt.pop %v79
    %v82 = vrsqrt.pop %v80
    %v83 = vmul.f32 %v77, %v81
    %v84 = vmul.f32 %v78, %v82
    %v85 = vld [vmem:[%s2] sm:$0x1]
    %v87 = vlaneseq
    %v88 = vshrl.u32 %v87, 7
    %v89 = vsub.s32 0, %v88
    %v90 = vrot.slane %v85, %v89
    %v92 = vmul.f32 %v90, %v83
    %v93 = vmul.f32 %v90, %v84
    %v94 = vld [vmem:[%s3] sm:$0x1]
    %v96 = vlaneseq
    %v97 = vshrl.u32 %v96, 7
    %v98 = vsub.s32 0, %v97
    %v99 = vrot.slane %v94, %v98
    %v101 = vadd.f32 %v92, %v99
    %v102 = vadd.f32 %v93, %v99
    %103 = vst.msk [vmem:[#allocation7] sm:$0xff] %vm52, %v101
    %104 = vst.msk [vmem:[#allocation7 + $0x8] sm:$0xff] %vm52, %v102
    // Predicated region
    $region26: #{tpu_custom_call.1} parent=1 // pred_check
      _
    $region27: #{tpu_custom_call.1} parent=1 // pred_check_branch
      %106 = sbr.rel (0) target = $region29
    $region28: #{tpu_custom_call.1} parent=1 // pred_region
      %s108 = ssub.s32 256, 256
      %109 = vsyncadd [#allocation4], %s108
      %s110 = sshll.u32 [#allocation7], 4
      %s111 = int_to_ptr.vmem [resolvable:$true] %s110
      %116 = dma.vmem_to_hbm [thread:$0]  %s111, 256, %s4, [#allocation4], 128, 128, 8
    $region29: #{tpu_custom_call.1} parent=1 // pred_fallthru
      _
    // Predicated region
    $region30: #{tpu_custom_call.1} parent=1 // pred_check
      _
    $region31: #{tpu_custom_call.1} parent=1 // pred_check_branch
      %118 = sbr.rel (0) target = $region33
    $region32: #{tpu_custom_call.1} parent=1 // pred_region
      %119 = dma.done [#allocation4], 256
    $region33: #{tpu_custom_call.1} parent=1 // pred_fallthru
      _
    %120 = vsyncpa [#allocation3], 1
    %121 = vsyncpa [#allocation6], 1
    %122 = vsyncpa [#allocation4], 1

</llo_original>
